<compile_context>
chip_gen: v5e
topology: v5e:2x2
jax: 0.10.0
libtpu: 0.0.40
codegen_flags: <defaults>
</compile_context>

<pallas_src>
import math
from functools import partial

import jax
import jax.numpy as jnp
import numpy as np
from jax import lax
from jax.experimental import pallas as pl
from jax.experimental.pallas import tpu as pltpu

EMBED_DIM = 32        # embedding_dim (divisible by n_heads)
N_HEADS = 8
NUM_AGENTS = 2
TANH_CLIPPING = 10.0
TEMP = 1.0
DEPOT_DIM = 3         # init_embed_depot: Linear(3, E)
NODE_FEAT_DIM = 4     # init_embed:       Linear(4, E)  (loc(3) + prize(1))
FEAT_DIM = DEPOT_DIM + 1 + NODE_FEAT_DIM + 1   # 9 = [depot(3), is_depot, node(4), is_node]


# ----------------------------- parameters ---------------------------------- #
def init_params(key, embed_dim=EMBED_DIM):
    ks = jax.random.split(key, 8)

    def lin(k, out_dim, in_dim):
        scale = 1.0 / math.sqrt(in_dim)
        return jax.random.uniform(k, (out_dim, in_dim), jnp.float32, -scale, scale)

    E = embed_dim
    W_depot = lin(ks[0], E, DEPOT_DIM)
    b_depot = jax.random.uniform(ks[1], (E,), jnp.float32, -0.1, 0.1)
    W_init = lin(ks[2], E, NODE_FEAT_DIM)
    b_init = jax.random.uniform(ks[3], (E,), jnp.float32, -0.1, 0.1)
    W_node = lin(ks[4], 3 * E, E)        # project_node_embeddings (no bias)
    W_fc = lin(ks[5], E, E)              # project_fixed_context   (no bias)
    W_step = lin(ks[6], E, E + 1)        # project_step_context    (no bias)
    W_out = lin(ks[7], E, E)             # project_out             (no bias)

    # store transposed so kernels do plain  x @ W_T  (matches torch  x @ W.T)
    return {
        "wd_T": W_depot.T,                 # (3, E)
        "bd": b_depot[None, :],            # (1, E)
        "wi_T": W_init.T,                  # (4, E)
        "bi": b_init[None, :],             # (1, E)
        "wn_T": W_node.T,                  # (E, 3E)
        "wfc_T": W_fc.T,                   # (E, E)
        "wstep_T": W_step.T,               # (E+1, E)
        "wout_T": W_out.T,                 # (E, E)
    }


# ---------------- fused init_embed + precompute + one decode step ---------------- #
def _fused_decoder_kernel(feat_ref, feat_t_ref, w_emb_ref, w_emb_t_ref,
                          w_k_ref, w_v_ref, w_l_ref, w_fc_ref,
                          w_step_e_ref, w_step_r_ref, w_out_ref,
                          mean_mat_ref, rep_ref, rep_t_ref, head_mask_ref, node_iota_ref,
                          cur_ref, rem_ref, mask_attn_ref, mask_logit_ref,
                          emb_ref, logp_ref, glimpse_ref,
                          *, n_heads, tanh_clipping, temp):
    f32 = jnp.float32
    neg_inf = f32(-jnp.inf)
    E = emb_ref.shape[-1]
    dk = E // n_heads
    inv_sqrt_dk = 1.0 / math.sqrt(dk)
    inv_sqrt_e = 1.0 / math.sqrt(E)

    # ---------- precompute (once per problem; hoistable outside a future in-kernel rollout) ----------
    # init_embed + init_embed_depot folded into a single (B*N, 9) @ (9, E) matmul (bias via indicators)
    emb_flat = jnp.dot(feat_ref[...], w_emb_ref[...], preferred_element_type=f32)      # (B*N, E)
    emb_t = jnp.dot(w_emb_t_ref[...], feat_t_ref[...], preferred_element_type=f32)     # (E, B*N)
    # project_node_embeddings; K/logit_K kept E-major (node-minor) so decode is plain q @ K_T
    k_t = jnp.dot(w_k_ref[...], emb_t, preferred_element_type=f32)                     # (E, B*N)
    l_t = jnp.dot(w_l_ref[...], emb_t, preferred_element_type=f32)                     # (E, B*N)
    v = jnp.dot(emb_flat, w_v_ref[...], preferred_element_type=f32)                    # (B*N, E)
    # project_fixed_context on the per-batch graph mean, already expanded to one row per (batch, agent)
    graph_ba = jnp.dot(mean_mat_ref[...], emb_flat, preferred_element_type=f32)        # (B*A, E)
    fixed_ba = jnp.dot(graph_ba, w_fc_ref[...], preferred_element_type=f32)            # (B*A, E)

    # ---------- decode step: all batches / agents / heads batched into single matmuls ----------
    # step-context gather: one broadcasted compare + one matmul (no scalar reads, no concatenates)
    onehot = (cur_ref[...] == node_iota_ref[...]).astype(f32)                          # (B*A, B*N)
    gathered = jnp.dot(onehot, emb_flat, preferred_element_type=f32)                   # (B*A, E)
    # query = fixed context + project_step_context([gathered_emb, remaining_ratio]) (rank-1 fold)
    q = fixed_ba + jnp.dot(gathered, w_step_e_ref[...], preferred_element_type=f32) \
        + rem_ref[...] * w_step_r_ref[...]                                             # (B*A, E)

    # expand query rows to (batch, agent, head) and zero off-head lanes -> per-head compat via one dot
    q_exp = jnp.dot(rep_ref[...], q, preferred_element_type=f32) * head_mask_ref[...]  # (B*A*H, E)
    compat = jnp.dot(q_exp, k_t, preferred_element_type=f32) * inv_sqrt_dk             # (B*A*H, B*N)
    compat = jnp.where(mask_attn_ref[...] > 0.5, neg_inf, compat)                      # node + cross-batch
    attn = jax.nn.softmax(compat, axis=-1)                                             # one row-softmax
    heads = jnp.dot(attn, v, preferred_element_type=f32)                               # (B*A*H, E)
    # per-lane head selection + per-agent row sum == concatenated heads
    glimpse = jnp.dot(rep_t_ref[...], heads * head_mask_ref[...],
                      preferred_element_type=f32)                                      # (B*A, E)
    final_q = jnp.dot(glimpse, w_out_ref[...], preferred_element_type=f32)             # (B*A, E)

    logits = jnp.dot(final_q, l_t, preferred_element_type=f32) * inv_sqrt_e            # (B*A, B*N)
    logits = jnp.tanh(logits) * tanh_clipping
    logits = jnp.where(mask_logit_ref[...] > 0.5, neg_inf, logits)                     # mask_logits
    # NOTE: wrapper/state must keep >=1 feasible node per (batch, agent) (end depot) or this NaNs.

    # lane-dense single stores; wrapper extracts per-batch diagonal blocks
    logp_ref[...] = jax.nn.log_softmax(logits / temp, axis=-1)
    glimpse_ref[...] = final_q
    emb_ref[...] = emb_flat


def attention_decode_step(depot, depot2, loc, prize, current_node, remaining_ratio, mask, params,
                          n_heads=N_HEADS, tanh_clipping=TANH_CLIPPING, temp=TEMP):
    B, G, _ = loc.shape
    N = G + 2
    E = params["wd_T"].shape[-1]
    A = current_node.shape[1]
    H = n_heads
    dk = E // H
    f32 = jnp.float32

    # ---- packed features: per-batch [depot, nodes..., end-depot] rows; 9 lanes [d(3),1,n(4),1] ----
    dep1 = jnp.concatenate([depot, jnp.ones((B, 1), f32), jnp.zeros((B, NODE_FEAT_DIM + 1), f32)], -1)
    dep2 = jnp.concatenate([depot2, jnp.ones((B, 1), f32), jnp.zeros((B, NODE_FEAT_DIM + 1), f32)], -1)
    nodef = jnp.concatenate([jnp.zeros((B, G, DEPOT_DIM + 1), f32), loc, prize[:, :, None],
                             jnp.ones((B, G, 1), f32)], -1)
    feat = jnp.concatenate([dep1[:, None, :], nodef, dep2[:, None, :]], 1).reshape(B * N, FEAT_DIM)

    # ---- stacked / re-sliced weights (host-side transposes are free layout work, done once) ----
    w_emb = jnp.concatenate([params["wd_T"], params["bd"], params["wi_T"], params["bi"]], 0)  # (9, E)
    wn_T = params["wn_T"]                                  # (E, 3E)
    w_k = wn_T[:, :E].T                                    # (E, E): K_T = w_k @ emb_T
    w_v = wn_T[:, E:2 * E]                                 # (E, E): V   = emb  @ w_v
    w_l = wn_T[:, 2 * E:].T                                # (E, E): L_T = w_l @ emb_T
    w_step_e = params["wstep_T"][:E, :]                    # (E, E)  embedding part
    w_step_r = params["wstep_T"][E:E + 1, :]               # (1, E)  remaining-ratio column

    # ---- constant selection matrices (numpy; DMA'd once, no in-kernel iota/compare setup) ----
    mean_mat = np.kron(np.eye(B, dtype=np.float32), np.ones((A, N), np.float32) / N)   # (B*A, B*N)
    rep = np.kron(np.eye(B * A, dtype=np.float32), np.ones((H, 1), np.float32))        # (B*A*H, B*A)
    head_mask = np.tile(np.kron(np.eye(H, dtype=np.float32), np.ones((1, dk), np.float32)),
                        (B * A, 1))                                                    # (B*A*H, E)
    node_iota = np.arange(B * N, dtype=np.float32).reshape(1, B * N)

    # ---- per-step dynamic state ----
    cur = (jnp.arange(B, dtype=jnp.int32)[:, None] * N + current_node.astype(jnp.int32))
    cur = cur.reshape(B * A, 1).astype(f32)                                            # flat node index
    rem = remaining_ratio.reshape(B * A, 1).astype(f32)
    cross = jnp.arange(B)[:, None] != jnp.arange(B)[None, :]                           # (B, B)
    blocked = cross[:, None, None, :, None] | (mask > 0)[:, :, None, None, :]          # (B,A,1,B,N)
    mask_attn = jnp.broadcast_to(blocked, (B, A, H, B, N)).reshape(B * A * H, B * N).astype(f32)
    mask_logit = blocked[:, :, 0].reshape(B * A, B * N).astype(f32)

    inputs = (feat, feat.T, w_emb, w_emb.T, w_k, w_v, w_l, params["wfc_T"],
              w_step_e, w_step_r, params["wout_T"],
              jnp.asarray(mean_mat), jnp.asarray(rep), jnp.asarray(rep.T),
              jnp.asarray(head_mask), jnp.asarray(node_iota),
              cur, rem, mask_attn, mask_logit)

    def spec2d(x):
        return pl.BlockSpec(tuple(int(s) for s in x.shape), lambda i: (0, 0))

    kernel = partial(_fused_decoder_kernel, n_heads=n_heads,
                     tanh_clipping=tanh_clipping, temp=temp)

    emb_flat, logp_full, glimpse_flat = pl.pallas_call(
        kernel,
        out_shape=(jax.ShapeDtypeStruct((B * N, E), f32),          # node embeddings (flat)
                   jax.ShapeDtypeStruct((B * A, B * N), f32),      # log_p over stacked nodes
                   jax.ShapeDtypeStruct((B * A, E), f32)),         # glimpse (final_Q)
        grid=(1,),                                                 # single resident step (B is tiny)
        in_specs=[spec2d(x) for x in inputs],
        out_specs=(pl.BlockSpec((B * N, E), lambda i: (0, 0)),
                   pl.BlockSpec((B * A, B * N), lambda i: (0, 0)),
                   pl.BlockSpec((B * A, E), lambda i: (0, 0))),
        compiler_params=pltpu.CompilerParams(dimension_semantics=("arbitrary",)),
    )(*inputs)

    # extract each batch's diagonal block (kernel stores stay single, un-sliced writes)
    log_p = logp_full.reshape(B, A, B, N)[jnp.arange(B), :, jnp.arange(B), :]          # (B, A, N)
    glimpse = glimpse_flat.reshape(B, A, E)
    embeddings = emb_flat.reshape(B, N, E)
    return log_p, glimpse, embeddings


# ---------------------------- pure-JAX reference ----------------------------- #
def reference(depot, depot2, loc, prize, current_node, remaining_ratio, mask, params):
    d1 = depot @ params["wd_T"] + params["bd"][0]
    d2 = depot2 @ params["wd_T"] + params["bd"][0]
    nf = jnp.concatenate([loc, prize[:, :, None]], -1)
    nd = nf @ params["wi_T"] + params["bi"][0]
    emb = jnp.concatenate([d1[:, None, :], nd, d2[:, None, :]], axis=1)
    E = emb.shape[-1]
    B, N, _ = emb.shape
    fc = jnp.mean(emb, axis=1) @ params["wfc_T"]
    kvl = emb @ params["wn_T"]
    K, V, L = kvl[..., :E], kvl[..., E:2 * E], kvl[..., 2 * E:]
    gathered = jnp.take_along_axis(
        emb, current_node[:, :, None].astype(jnp.int32), axis=1)            # (B, A, E)
    sc = jnp.concatenate([gathered, remaining_ratio[:, :, None]], axis=-1)   # (B, A, E+1)
    q = fc[:, None, :] + sc @ params["wstep_T"]                              # (B, A, E)
    A = q.shape[1]
    dk = E // N_HEADS
    qh = q.reshape(B, A, N_HEADS, dk)
    Kh = K.reshape(B, N, N_HEADS, dk)
    Vh = V.reshape(B, N, N_HEADS, dk)
    compat = jnp.einsum('bahd,bnhd->bhan', qh, Kh) / math.sqrt(dk)
    m = (mask > 0)
    compat = jnp.where(m[:, None, :, :], -jnp.inf, compat)
    attn = jax.nn.softmax(compat, axis=-1)
    heads = jnp.einsum('bhan,bnhd->bahd', attn, Vh).reshape(B, A, E)
    final_q = heads @ params["wout_T"]
    logits = jnp.einsum('bae,bne->ban', final_q, L) / math.sqrt(E)
    logits = jnp.tanh(logits) * TANH_CLIPPING
    logits = jnp.where(m, -jnp.inf, logits)
    logp = jax.nn.log_softmax(logits / TEMP, axis=-1)
    return logp, final_q, emb, kvl


# --------------------------------- main -------------------------------------- #
if __name__ == "__main__":
    key = jax.random.PRNGKey(0)
    k_par, k_dep, k_dep2, k_loc, k_prz, k_cur, k_rem, k_msk = jax.random.split(key, 8)

    B, G = 2, 8
    N = G + 2                                  # depot + G nodes + end depot
    params = init_params(k_par)

    depot = jax.random.uniform(k_dep, (B, DEPOT_DIM), jnp.float32)
    depot2 = jax.random.uniform(k_dep2, (B, DEPOT_DIM), jnp.float32)
    loc = jax.random.uniform(k_loc, (B, G, DEPOT_DIM), jnp.float32)
    prize = jax.random.uniform(k_prz, (B, G), jnp.float32)

    # synthetic decoder state (see TODO above): current nodes, remaining-length ratios, masks
    current_node = jax.random.randint(k_cur, (B, NUM_AGENTS), 0, N)
    remaining_ratio = jax.random.uniform(k_rem, (B, NUM_AGENTS), jnp.float32, 0.1, 1.0)
    mask = jax.random.bernoulli(k_msk, 0.3, (B, NUM_AGENTS, N)).astype(jnp.int32)
    mask = mask.at[:, :, -1].set(0)            # end depot always feasible (never fully masked)

    # --- fused Pallas decoder step ---
    log_p, glimpse, embeddings = attention_decode_step(
        depot, depot2, loc, prize, current_node, remaining_ratio, mask, params)
    jax.block_until_ready((log_p, glimpse, embeddings))

    # --- validate against pure-JAX reference ---
    logp_ref, glimpse_ref, emb_ref, _ = reference(
        depot, depot2, loc, prize, current_node, remaining_ratio, mask, params)
    assert np.allclose(np.asarray(embeddings), np.asarray(emb_ref), atol=1e-4, rtol=1e-4)
    assert np.allclose(np.asarray(glimpse), np.asarray(glimpse_ref), atol=1e-4, rtol=1e-4)
    assert np.allclose(np.asarray(log_p), np.asarray(logp_ref), atol=1e-4, rtol=1e-4)

    print("KERNEL_OK")
</pallas_src>

<mosaic_0001>
module attributes {stable_mosaic.version = 11 : i64} {
  func.func @_fused_decoder_kernel(%arg0: i32, %arg1: memref<20x9xf32, #tpu.memory_space<vmem>>, %arg2: memref<9x20xf32, #tpu.memory_space<vmem>>, %arg3: memref<9x32xf32, #tpu.memory_space<vmem>>, %arg4: memref<32x9xf32, #tpu.memory_space<vmem>>, %arg5: memref<32x32xf32, #tpu.memory_space<vmem>>, %arg6: memref<32x32xf32, #tpu.memory_space<vmem>>, %arg7: memref<32x32xf32, #tpu.memory_space<vmem>>, %arg8: memref<32x32xf32, #tpu.memory_space<vmem>>, %arg9: memref<32x32xf32, #tpu.memory_space<vmem>>, %arg10: memref<1x32xf32, #tpu.memory_space<vmem>>, %arg11: memref<32x32xf32, #tpu.memory_space<vmem>>, %arg12: memref<4x20xf32, #tpu.memory_space<vmem>>, %arg13: memref<32x4xf32, #tpu.memory_space<vmem>>, %arg14: memref<4x32xf32, #tpu.memory_space<vmem>>, %arg15: memref<32x32xf32, #tpu.memory_space<vmem>>, %arg16: memref<1x20xf32, #tpu.memory_space<vmem>>, %arg17: memref<4x1xf32, #tpu.memory_space<vmem>>, %arg18: memref<4x1xf32, #tpu.memory_space<vmem>>, %arg19: memref<32x20xf32, #tpu.memory_space<vmem>>, %arg20: memref<4x20xf32, #tpu.memory_space<vmem>>, %arg21: memref<20x32xf32, #tpu.memory_space<vmem>>, %arg22: memref<4x20xf32, #tpu.memory_space<vmem>>, %arg23: memref<4x32xf32, #tpu.memory_space<vmem>>) attributes {dimension_semantics = [#tpu.dimension_semantics<arbitrary>], iteration_bounds = array<i64: 1>, scalar_prefetch = 0 : i64, scratch_operands = 0 : i64, tpu.core_type = #tpu.core_type<tc>, window_params = [{pipeline_mode = #tpu.pipeline_mode<synchronous>, transform_indices = @transform_0, window_bounds = array<i64: 20, 9>}, {pipeline_mode = #tpu.pipeline_mode<synchronous>, transform_indices = @transform_1, window_bounds = array<i64: 9, 20>}, {pipeline_mode = #tpu.pipeline_mode<synchronous>, transform_indices = @transform_2, window_bounds = array<i64: 9, 32>}, {pipeline_mode = #tpu.pipeline_mode<synchronous>, transform_indices = @transform_3, window_bounds = array<i64: 32, 9>}, {pipeline_mode = #tpu.pipeline_mode<synchronous>, transform_indices = @transform_4, window_bounds = array<i64: 32, 32>}, {pipeline_mode = #tpu.pipeline_mode<synchronous>, transform_indices = @transform_5, window_bounds = array<i64: 32, 32>}, {pipeline_mode = #tpu.pipeline_mode<synchronous>, transform_indices = @transform_6, window_bounds = array<i64: 32, 32>}, {pipeline_mode = #tpu.pipeline_mode<synchronous>, transform_indices = @transform_7, window_bounds = array<i64: 32, 32>}, {pipeline_mode = #tpu.pipeline_mode<synchronous>, transform_indices = @transform_8, window_bounds = array<i64: 32, 32>}, {pipeline_mode = #tpu.pipeline_mode<synchronous>, transform_indices = @transform_9, window_bounds = array<i64: 1, 32>}, {pipeline_mode = #tpu.pipeline_mode<synchronous>, transform_indices = @transform_10, window_bounds = array<i64: 32, 32>}, {pipeline_mode = #tpu.pipeline_mode<synchronous>, transform_indices = @transform_11, window_bounds = array<i64: 4, 20>}, {pipeline_mode = #tpu.pipeline_mode<synchronous>, transform_indices = @transform_12, window_bounds = array<i64: 32, 4>}, {pipeline_mode = #tpu.pipeline_mode<synchronous>, transform_indices = @transform_13, window_bounds = array<i64: 4, 32>}, {pipeline_mode = #tpu.pipeline_mode<synchronous>, transform_indices = @transform_14, window_bounds = array<i64: 32, 32>}, {pipeline_mode = #tpu.pipeline_mode<synchronous>, transform_indices = @transform_15, window_bounds = array<i64: 1, 20>}, {pipeline_mode = #tpu.pipeline_mode<synchronous>, transform_indices = @transform_16, window_bounds = array<i64: 4, 1>}, {pipeline_mode = #tpu.pipeline_mode<synchronous>, transform_indices = @transform_17, window_bounds = array<i64: 4, 1>}, {pipeline_mode = #tpu.pipeline_mode<synchronous>, transform_indices = @transform_18, window_bounds = array<i64: 32, 20>}, {pipeline_mode = #tpu.pipeline_mode<synchronous>, transform_indices = @transform_19, window_bounds = array<i64: 4, 20>}, {pipeline_mode = #tpu.pipeline_mode<synchronous>, transform_indices = @transform_20, window_bounds = array<i64: 20, 32>}, {pipeline_mode = #tpu.pipeline_mode<synchronous>, transform_indices = @transform_21, window_bounds = array<i64: 4, 20>}, {pipeline_mode = #tpu.pipeline_mode<synchronous>, transform_indices = @transform_22, window_bounds = array<i64: 4, 32>}]} {
    %c0 = arith.constant 0 : index
    %c0_0 = arith.constant 0 : index
    %0 = vector.load %arg1[%c0, %c0_0] : memref<20x9xf32, #tpu.memory_space<vmem>>, vector<20x9xf32>
    %c0_1 = arith.constant 0 : index
    %c0_2 = arith.constant 0 : index
    %1 = vector.load %arg3[%c0_1, %c0_2] : memref<9x32xf32, #tpu.memory_space<vmem>>, vector<9x32xf32>
    %cst = arith.constant dense<0.000000e+00> : vector<20x32xf32>
    %2 = tpu.matmul %0, %1, %cst {dimension_numbers = #tpu.dot_dimension_numbers<[1], [0], [0], [1], [0, 0, 1, 1], [], []>} : vector<20x9xf32>, vector<9x32xf32>, vector<20x32xf32> -> vector<20x32xf32>
    %c0_3 = arith.constant 0 : index
    %c0_4 = arith.constant 0 : index
    %3 = vector.load %arg4[%c0_3, %c0_4] : memref<32x9xf32, #tpu.memory_space<vmem>>, vector<32x9xf32>
    %c0_5 = arith.constant 0 : index
    %c0_6 = arith.constant 0 : index
    %4 = vector.load %arg2[%c0_5, %c0_6] : memref<9x20xf32, #tpu.memory_space<vmem>>, vector<9x20xf32>
    %cst_7 = arith.constant dense<0.000000e+00> : vector<32x20xf32>
    %5 = tpu.matmul %3, %4, %cst_7 {dimension_numbers = #tpu.dot_dimension_numbers<[1], [0], [0], [1], [0, 0, 1, 1], [], []>} : vector<32x9xf32>, vector<9x20xf32>, vector<32x20xf32> -> vector<32x20xf32>
    %c0_8 = arith.constant 0 : index
    %c0_9 = arith.constant 0 : index
    %6 = vector.load %arg5[%c0_8, %c0_9] : memref<32x32xf32, #tpu.memory_space<vmem>>, vector<32x32xf32>
    %cst_10 = arith.constant dense<0.000000e+00> : vector<32x20xf32>
    %7 = tpu.matmul %6, %5, %cst_10 {dimension_numbers = #tpu.dot_dimension_numbers<[1], [0], [0], [1], [0, 0, 1, 1], [], []>} : vector<32x32xf32>, vector<32x20xf32>, vector<32x20xf32> -> vector<32x20xf32>
    %c0_11 = arith.constant 0 : index
    %c0_12 = arith.constant 0 : index
    %8 = vector.load %arg7[%c0_11, %c0_12] : memref<32x32xf32, #tpu.memory_space<vmem>>, vector<32x32xf32>
    %cst_13 = arith.constant dense<0.000000e+00> : vector<32x20xf32>
    %9 = tpu.matmul %8, %5, %cst_13 {dimension_numbers = #tpu.dot_dimension_numbers<[1], [0], [0], [1], [0, 0, 1, 1], [], []>} : vector<32x32xf32>, vector<32x20xf32>, vector<32x20xf32> -> vector<32x20xf32>
    %c0_14 = arith.constant 0 : index
    %c0_15 = arith.constant 0 : index
    %10 = vector.load %arg6[%c0_14, %c0_15] : memref<32x32xf32, #tpu.memory_space<vmem>>, vector<32x32xf32>
    %cst_16 = arith.constant dense<0.000000e+00> : vector<20x32xf32>
    %11 = tpu.matmul %2, %10, %cst_16 {dimension_numbers = #tpu.dot_dimension_numbers<[1], [0], [0], [1], [0, 0, 1, 1], [], []>} : vector<20x32xf32>, vector<32x32xf32>, vector<20x32xf32> -> vector<20x32xf32>
    %c0_17 = arith.constant 0 : index
    %c0_18 = arith.constant 0 : index
    %12 = vector.load %arg12[%c0_17, %c0_18] : memref<4x20xf32, #tpu.memory_space<vmem>>, vector<4x20xf32>
    %cst_19 = arith.constant dense<0.000000e+00> : vector<4x32xf32>
    %13 = tpu.matmul %12, %2, %cst_19 {dimension_numbers = #tpu.dot_dimension_numbers<[1], [0], [0], [1], [0, 0, 1, 1], [], []>} : vector<4x20xf32>, vector<20x32xf32>, vector<4x32xf32> -> vector<4x32xf32>
    %c0_20 = arith.constant 0 : index
    %c0_21 = arith.constant 0 : index
    %14 = vector.load %arg8[%c0_20, %c0_21] : memref<32x32xf32, #tpu.memory_space<vmem>>, vector<32x32xf32>
    %cst_22 = arith.constant dense<0.000000e+00> : vector<4x32xf32>
    %15 = tpu.matmul %13, %14, %cst_22 {dimension_numbers = #tpu.dot_dimension_numbers<[1], [0], [0], [1], [0, 0, 1, 1], [], []>} : vector<4x32xf32>, vector<32x32xf32>, vector<4x32xf32> -> vector<4x32xf32>
    %c0_23 = arith.constant 0 : index
    %c0_24 = arith.constant 0 : index
    %16 = vector.load %arg17[%c0_23, %c0_24] : memref<4x1xf32, #tpu.memory_space<vmem>>, vector<4x1xf32>
    %c0_25 = arith.constant 0 : index
    %c0_26 = arith.constant 0 : index
    %17 = vector.load %arg16[%c0_25, %c0_26] : memref<1x20xf32, #tpu.memory_space<vmem>>, vector<1x20xf32>
    %18 = vector.broadcast %16 : vector<4x1xf32> to vector<4x20xf32>
    %19 = vector.broadcast %17 : vector<1x20xf32> to vector<4x20xf32>
    %20 = arith.cmpf oeq, %18, %19 : vector<4x20xf32>
    %21 = arith.extui %20 : vector<4x20xi1> to vector<4x20xi32>
    %22 = arith.sitofp %21 : vector<4x20xi32> to vector<4x20xf32>
    %cst_27 = arith.constant dense<0.000000e+00> : vector<4x32xf32>
    %23 = tpu.matmul %22, %2, %cst_27 {dimension_numbers = #tpu.dot_dimension_numbers<[1], [0], [0], [1], [0, 0, 1, 1], [], []>} : vector<4x20xf32>, vector<20x32xf32>, vector<4x32xf32> -> vector<4x32xf32>
    %c0_28 = arith.constant 0 : index
    %c0_29 = arith.constant 0 : index
    %24 = vector.load %arg9[%c0_28, %c0_29] : memref<32x32xf32, #tpu.memory_space<vmem>>, vector<32x32xf32>
    %cst_30 = arith.constant dense<0.000000e+00> : vector<4x32xf32>
    %25 = tpu.matmul %23, %24, %cst_30 {dimension_numbers = #tpu.dot_dimension_numbers<[1], [0], [0], [1], [0, 0, 1, 1], [], []>} : vector<4x32xf32>, vector<32x32xf32>, vector<4x32xf32> -> vector<4x32xf32>
    %26 = arith.addf %15, %25 : vector<4x32xf32>
    %c0_31 = arith.constant 0 : index
    %c0_32 = arith.constant 0 : index
    %27 = vector.load %arg18[%c0_31, %c0_32] : memref<4x1xf32, #tpu.memory_space<vmem>>, vector<4x1xf32>
    %c0_33 = arith.constant 0 : index
    %c0_34 = arith.constant 0 : index
    %28 = vector.load %arg10[%c0_33, %c0_34] : memref<1x32xf32, #tpu.memory_space<vmem>>, vector<1x32xf32>
    %29 = vector.broadcast %27 : vector<4x1xf32> to vector<4x32xf32>
    %30 = vector.broadcast %28 : vector<1x32xf32> to vector<4x32xf32>
    %31 = arith.mulf %29, %30 : vector<4x32xf32>
    %32 = arith.addf %26, %31 : vector<4x32xf32>
    %c0_35 = arith.constant 0 : index
    %c0_36 = arith.constant 0 : index
    %33 = vector.load %arg13[%c0_35, %c0_36] : memref<32x4xf32, #tpu.memory_space<vmem>>, vector<32x4xf32>
    %cst_37 = arith.constant dense<0.000000e+00> : vector<32x32xf32>
    %34 = tpu.matmul %33, %32, %cst_37 {dimension_numbers = #tpu.dot_dimension_numbers<[1], [0], [0], [1], [0, 0, 1, 1], [], []>} : vector<32x4xf32>, vector<4x32xf32>, vector<32x32xf32> -> vector<32x32xf32>
    %c0_38 = arith.constant 0 : index
    %c0_39 = arith.constant 0 : index
    %35 = vector.load %arg15[%c0_38, %c0_39] : memref<32x32xf32, #tpu.memory_space<vmem>>, vector<32x32xf32>
    %36 = arith.mulf %34, %35 : vector<32x32xf32>
    %cst_40 = arith.constant dense<0.000000e+00> : vector<32x20xf32>
    %37 = tpu.matmul %36, %7, %cst_40 {dimension_numbers = #tpu.dot_dimension_numbers<[1], [0], [0], [1], [0, 0, 1, 1], [], []>} : vector<32x32xf32>, vector<32x20xf32>, vector<32x20xf32> -> vector<32x20xf32>
    %cst_41 = arith.constant 5.000000e-01 : f32
    %38 = vector.broadcast %cst_41 : f32 to vector<32x20xf32>
    %39 = arith.mulf %37, %38 : vector<32x20xf32>
    %c0_42 = arith.constant 0 : index
    %c0_43 = arith.constant 0 : index
    %40 = vector.load %arg19[%c0_42, %c0_43] : memref<32x20xf32, #tpu.memory_space<vmem>>, vector<32x20xf32>
    %cst_44 = arith.constant 5.000000e-01 : f32
    %41 = vector.broadcast %cst_44 : f32 to vector<32x20xf32>
    %42 = arith.cmpf ogt, %40, %41 : vector<32x20xf32>
    %cst_45 = arith.constant 0xFF800000 : f32
    %43 = vector.broadcast %cst_45 : f32 to vector<32x20xf32>
    %44 = arith.select %42, %43, %39 : vector<32x20xi1>, vector<32x20xf32>
    %cst_46 = arith.constant dense<0xFF800000> : vector<32xf32>
    %45 = vector.multi_reduction <maximumf>, %44, %cst_46 [1] : vector<32x20xf32> to vector<32xf32>
    %cst_47 = arith.constant 0xFF800000 : f32
    %46 = vector.broadcast %cst_47 : f32 to vector<32xf32>
    %47 = arith.maximumf %46, %45 : vector<32xf32>
    %48 = vector.shape_cast %47 : vector<32xf32> to vector<32x1xf32>
    %49 = vector.broadcast %48 : vector<32x1xf32> to vector<32x20xf32>
    %50 = arith.subf %44, %49 : vector<32x20xf32>
    %51 = math.exp %50 : vector<32x20xf32>
    %cst_48 = arith.constant dense<0.000000e+00> : vector<32xf32>
    %52 = vector.multi_reduction <add>, %51, %cst_48 [1] : vector<32x20xf32> to vector<32xf32>
    %53 = vector.shape_cast %52 : vector<32xf32> to vector<32x1xf32>
    %54 = vector.broadcast %53 : vector<32x1xf32> to vector<32x20xf32>
    %55 = arith.divf %51, %54 : vector<32x20xf32>
    %cst_49 = arith.constant dense<0.000000e+00> : vector<32x32xf32>
    %56 = tpu.matmul %55, %11, %cst_49 {dimension_numbers = #tpu.dot_dimension_numbers<[1], [0], [0], [1], [0, 0, 1, 1], [], []>} : vector<32x20xf32>, vector<20x32xf32>, vector<32x32xf32> -> vector<32x32xf32>
    %c0_50 = arith.constant 0 : index
    %c0_51 = arith.constant 0 : index
    %57 = vector.load %arg14[%c0_50, %c0_51] : memref<4x32xf32, #tpu.memory_space<vmem>>, vector<4x32xf32>
    %c0_52 = arith.constant 0 : index
    %c0_53 = arith.constant 0 : index
    %58 = vector.load %arg15[%c0_52, %c0_53] : memref<32x32xf32, #tpu.memory_space<vmem>>, vector<32x32xf32>
    %59 = arith.mulf %56, %58 : vector<32x32xf32>
    %cst_54 = arith.constant dense<0.000000e+00> : vector<4x32xf32>
    %60 = tpu.matmul %57, %59, %cst_54 {dimension_numbers = #tpu.dot_dimension_numbers<[1], [0], [0], [1], [0, 0, 1, 1], [], []>} : vector<4x32xf32>, vector<32x32xf32>, vector<4x32xf32> -> vector<4x32xf32>
    %c0_55 = arith.constant 0 : index
    %c0_56 = arith.constant 0 : index
    %61 = vector.load %arg11[%c0_55, %c0_56] : memref<32x32xf32, #tpu.memory_space<vmem>>, vector<32x32xf32>
    %cst_57 = arith.constant dense<0.000000e+00> : vector<4x32xf32>
    %62 = tpu.matmul %60, %61, %cst_57 {dimension_numbers = #tpu.dot_dimension_numbers<[1], [0], [0], [1], [0, 0, 1, 1], [], []>} : vector<4x32xf32>, vector<32x32xf32>, vector<4x32xf32> -> vector<4x32xf32>
    %cst_58 = arith.constant dense<0.000000e+00> : vector<4x20xf32>
    %63 = tpu.matmul %62, %9, %cst_58 {dimension_numbers = #tpu.dot_dimension_numbers<[1], [0], [0], [1], [0, 0, 1, 1], [], []>} : vector<4x32xf32>, vector<32x20xf32>, vector<4x20xf32> -> vector<4x20xf32>
    %cst_59 = arith.constant 0.176776692 : f32
    %64 = vector.broadcast %cst_59 : f32 to vector<4x20xf32>
    %65 = arith.mulf %63, %64 : vector<4x20xf32>
    %66 = math.tanh %65 : vector<4x20xf32>
    %cst_60 = arith.constant 1.000000e+01 : f32
    %67 = vector.broadcast %cst_60 : f32 to vector<4x20xf32>
    %68 = arith.mulf %66, %67 : vector<4x20xf32>
    %c0_61 = arith.constant 0 : index
    %c0_62 = arith.constant 0 : index
    %69 = vector.load %arg20[%c0_61, %c0_62] : memref<4x20xf32, #tpu.memory_space<vmem>>, vector<4x20xf32>
    %cst_63 = arith.constant 5.000000e-01 : f32
    %70 = vector.broadcast %cst_63 : f32 to vector<4x20xf32>
    %71 = arith.cmpf ogt, %69, %70 : vector<4x20xf32>
    %cst_64 = arith.constant 0xFF800000 : f32
    %72 = vector.broadcast %cst_64 : f32 to vector<4x20xf32>
    %73 = arith.select %71, %72, %68 : vector<4x20xi1>, vector<4x20xf32>
    %cst_65 = arith.constant 1.000000e+00 : f32
    %74 = vector.broadcast %cst_65 : f32 to vector<4x20xf32>
    %75 = arith.divf %73, %74 : vector<4x20xf32>
    %cst_66 = arith.constant dense<0xFF800000> : vector<4xf32>
    %76 = vector.multi_reduction <maximumf>, %75, %cst_66 [1] : vector<4x20xf32> to vector<4xf32>
    %cst_67 = arith.constant 0xFF800000 : f32
    %77 = vector.broadcast %cst_67 : f32 to vector<4xf32>
    %78 = arith.maximumf %77, %76 : vector<4xf32>
    %79 = vector.shape_cast %78 : vector<4xf32> to vector<4x1xf32>
    %80 = vector.broadcast %79 : vector<4x1xf32> to vector<4x20xf32>
    %81 = arith.subf %75, %80 : vector<4x20xf32>
    %82 = math.exp %81 : vector<4x20xf32>
    %cst_68 = arith.constant dense<0.000000e+00> : vector<4xf32>
    %83 = vector.multi_reduction <add>, %82, %cst_68 [1] : vector<4x20xf32> to vector<4xf32>
    %84 = vector.shape_cast %83 : vector<4xf32> to vector<4x1xf32>
    %85 = math.log %84 : vector<4x1xf32>
    %86 = vector.broadcast %85 : vector<4x1xf32> to vector<4x20xf32>
    %87 = arith.subf %81, %86 : vector<4x20xf32>
    %c0_69 = arith.constant 0 : index
    %c0_70 = arith.constant 0 : index
    %88 = vector.load %arg22[%c0_69, %c0_70] : memref<4x20xf32, #tpu.memory_space<vmem>>, vector<4x20xf32>
    tpu.vector_store %arg22[%c0_69, %c0_70], %87 {strides = array<i32>} : memref<4x20xf32, #tpu.memory_space<vmem>>, vector<4x20xf32>,
    %c0_71 = arith.constant 0 : index
    %c0_72 = arith.constant 0 : index
    %89 = vector.load %arg23[%c0_71, %c0_72] : memref<4x32xf32, #tpu.memory_space<vmem>>, vector<4x32xf32>
    tpu.vector_store %arg23[%c0_71, %c0_72], %62 {strides = array<i32>} : memref<4x32xf32, #tpu.memory_space<vmem>>, vector<4x32xf32>,
    %c0_73 = arith.constant 0 : index
    %c0_74 = arith.constant 0 : index
    %90 = vector.load %arg21[%c0_73, %c0_74] : memref<20x32xf32, #tpu.memory_space<vmem>>, vector<20x32xf32>
    tpu.vector_store %arg21[%c0_73, %c0_74], %2 {strides = array<i32>} : memref<20x32xf32, #tpu.memory_space<vmem>>, vector<20x32xf32>,
    return
  }
  func.func @transform_0(%arg0: i32) -> (i32, i32) {
    %c0_i32 = arith.constant 0 : i32
    %c0_i32_0 = arith.constant 0 : i32
    %c0_i32_1 = arith.constant 0 : i32
    return %c0_i32, %c0_i32_0 : i32, i32
  }
  func.func @transform_1(%arg0: i32) -> (i32, i32) {
    %c0_i32 = arith.constant 0 : i32
    %c0_i32_0 = arith.constant 0 : i32
    %c0_i32_1 = arith.constant 0 : i32
    return %c0_i32, %c0_i32_0 : i32, i32
  }
  func.func @transform_2(%arg0: i32) -> (i32, i32) {
    %c0_i32 = arith.constant 0 : i32
    %c0_i32_0 = arith.constant 0 : i32
    %c0_i32_1 = arith.constant 0 : i32
    return %c0_i32, %c0_i32_0 : i32, i32
  }
  func.func @transform_3(%arg0: i32) -> (i32, i32) {
    %c0_i32 = arith.constant 0 : i32
    %c0_i32_0 = arith.constant 0 : i32
    %c0_i32_1 = arith.constant 0 : i32
    return %c0_i32, %c0_i32_0 : i32, i32
  }
  func.func @transform_4(%arg0: i32) -> (i32, i32) {
    %c0_i32 = arith.constant 0 : i32
    %c0_i32_0 = arith.constant 0 : i32
    %c0_i32_1 = arith.constant 0 : i32
    return %c0_i32, %c0_i32_0 : i32, i32
  }
  func.func @transform_5(%arg0: i32) -> (i32, i32) {
    %c0_i32 = arith.constant 0 : i32
    %c0_i32_0 = arith.constant 0 : i32
    %c0_i32_1 = arith.constant 0 : i32
    return %c0_i32, %c0_i32_0 : i32, i32
  }
  func.func @transform_6(%arg0: i32) -> (i32, i32) {
    %c0_i32 = arith.constant 0 : i32
    %c0_i32_0 = arith.constant 0 : i32
    %c0_i32_1 = arith.constant 0 : i32
    return %c0_i32, %c0_i32_0 : i32, i32
  }
  func.func @transform_7(%arg0: i32) -> (i32, i32) {
    %c0_i32 = arith.constant 0 : i32
    %c0_i32_0 = arith.constant 0 : i32
    %c0_i32_1 = arith.constant 0 : i32
    return %c0_i32, %c0_i32_0 : i32, i32
  }
  func.func @transform_8(%arg0: i32) -> (i32, i32) {
    %c0_i32 = arith.constant 0 : i32
    %c0_i32_0 = arith.constant 0 : i32
    %c0_i32_1 = arith.constant 0 : i32
    return %c0_i32, %c0_i32_0 : i32, i32
  }
  func.func @transform_9(%arg0: i32) -> (i32, i32) {
    %c0_i32 = arith.constant 0 : i32
    %c0_i32_0 = arith.constant 0 : i32
    %c0_i32_1 = arith.constant 0 : i32
    return %c0_i32, %c0_i32_0 : i32, i32
  }
  func.func @transform_10(%arg0: i32) -> (i32, i32) {
    %c0_i32 = arith.constant 0 : i32
    %c0_i32_0 = arith.constant 0 : i32
    %c0_i32_1 = arith.constant 0 : i32
    return %c0_i32, %c0_i32_0 : i32, i32
  }
  func.func @transform_11(%arg0: i32) -> (i32, i32) {
    %c0_i32 = arith.constant 0 : i32
    %c0_i32_0 = arith.constant 0 : i32
    %c0_i32_1 = arith.constant 0 : i32
    return %c0_i32, %c0_i32_0 : i32, i32
  }
  func.func @transform_12(%arg0: i32) -> (i32, i32) {
    %c0_i32 = arith.constant 0 : i32
    %c0_i32_0 = arith.constant 0 : i32
    %c0_i32_1 = arith.constant 0 : i32
    return %c0_i32, %c0_i32_0 : i32, i32
  }
  func.func @transform_13(%arg0: i32) -> (i32, i32) {
    %c0_i32 = arith.constant 0 : i32
    %c0_i32_0 = arith.constant 0 : i32
    %c0_i32_1 = arith.constant 0 : i32
    return %c0_i32, %c0_i32_0 : i32, i32
  }
  func.func @transform_14(%arg0: i32) -> (i32, i32) {
    %c0_i32 = arith.constant 0 : i32
    %c0_i32_0 = arith.constant 0 : i32
    %c0_i32_1 = arith.constant 0 : i32
    return %c0_i32, %c0_i32_0 : i32, i32
  }
  func.func @transform_15(%arg0: i32) -> (i32, i32) {
    %c0_i32 = arith.constant 0 : i32
    %c0_i32_0 = arith.constant 0 : i32
    %c0_i32_1 = arith.constant 0 : i32
    return %c0_i32, %c0_i32_0 : i32, i32
  }
  func.func @transform_16(%arg0: i32) -> (i32, i32) {
    %c0_i32 = arith.constant 0 : i32
    %c0_i32_0 = arith.constant 0 : i32
    %c0_i32_1 = arith.constant 0 : i32
    return %c0_i32, %c0_i32_0 : i32, i32
  }
  func.func @transform_17(%arg0: i32) -> (i32, i32) {
    %c0_i32 = arith.constant 0 : i32
    %c0_i32_0 = arith.constant 0 : i32
    %c0_i32_1 = arith.constant 0 : i32
    return %c0_i32, %c0_i32_0 : i32, i32
  }
  func.func @transform_18(%arg0: i32) -> (i32, i32) {
    %c0_i32 = arith.constant 0 : i32
    %c0_i32_0 = arith.constant 0 : i32
    %c0_i32_1 = arith.constant 0 : i32
    return %c0_i32, %c0_i32_0 : i32, i32
  }
  func.func @transform_19(%arg0: i32) -> (i32, i32) {
    %c0_i32 = arith.constant 0 : i32
    %c0_i32_0 = arith.constant 0 : i32
    %c0_i32_1 = arith.constant 0 : i32
    return %c0_i32, %c0_i32_0 : i32, i32
  }
  func.func @transform_20(%arg0: i32) -> (i32, i32) {
    %c0_i32 = arith.constant 0 : i32
    %c0_i32_0 = arith.constant 0 : i32
    %c0_i32_1 = arith.constant 0 : i32
    return %c0_i32, %c0_i32_0 : i32, i32
  }
  func.func @transform_21(%arg0: i32) -> (i32, i32) {
    %c0_i32 = arith.constant 0 : i32
    %c0_i32_0 = arith.constant 0 : i32
    %c0_i32_1 = arith.constant 0 : i32
    return %c0_i32, %c0_i32_0 : i32, i32
  }
  func.func @transform_22(%arg0: i32) -> (i32, i32) {
    %c0_i32 = arith.constant 0 : i32
    %c0_i32_0 = arith.constant 0 : i32
    %c0_i32_1 = arith.constant 0 : i32
    return %c0_i32, %c0_i32_0 : i32, i32
  }
}

</mosaic_0001>

<llo_original>
// kernel: tpu_custom_call.1
$region0: #{tpu_custom_call.1}
  #allocation0 [shape = 'u32[]', space=smem, size = 0x4, offset = 0x4, fixed_abs, tag = 'smem constant byte address 0x4 - core index']
  #allocation1 [shape = 'u32[72,128]{1,0:T(1,128)}', space=vmem, size = 0x9000, scoped, tag = 'internal scratch']
  %s0 = inlined_call_operand.vmem [shape: f32[20,9], index: 0, kind: input, shape index: {}]
  %s1 = inlined_call_operand.vmem [shape: f32[9,20], index: 1, kind: input, shape index: {}]
  %s2 = inlined_call_operand.hbm [shape: f32[9,32], index: 2, kind: input, shape index: {}]
  %s3 = inlined_call_operand.vmem [shape: f32[32,9], index: 3, kind: input, shape index: {}]
  %s4 = inlined_call_operand.vmem [shape: f32[32,32], index: 4, kind: input, shape index: {}]
  %s5 = inlined_call_operand.vmem [shape: f32[32,32], index: 5, kind: input, shape index: {}]
  %s6 = inlined_call_operand.vmem [shape: f32[32,32], index: 6, kind: input, shape index: {}]
  %s7 = inlined_call_operand.vmem [shape: f32[32,32], index: 7, kind: input, shape index: {}]
  %s8 = inlined_call_operand.hbm [shape: f32[32,32], index: 8, kind: input, shape index: {}]
  %s9 = inlined_call_operand.vmem [shape: f32[1,32], index: 9, kind: input, shape index: {}]
  %s10 = inlined_call_operand.hbm [shape: f32[32,32], index: 10, kind: input, shape index: {}]
  %s11 = inlined_call_operand.vmem [shape: f32[4,20], index: 11, kind: input, shape index: {}]
  %s12 = inlined_call_operand.vmem [shape: f32[32,4], index: 12, kind: input, shape index: {}]
  %s13 = inlined_call_operand.vmem [shape: f32[4,32], index: 13, kind: input, shape index: {}]
  %s14 = inlined_call_operand.hbm [shape: f32[32,32], index: 14, kind: input, shape index: {}]
  %s15 = inlined_call_operand.vmem [shape: f32[1,20], index: 15, kind: input, shape index: {}]
  %s16 = inlined_call_operand.vmem [shape: f32[4,1], index: 16, kind: input, shape index: {}]
  %s17 = inlined_call_operand.vmem [shape: f32[4,1], index: 17, kind: input, shape index: {}]
  %s18 = inlined_call_operand.vmem [shape: f32[32,20], index: 18, kind: input, shape index: {}]
  %s19 = inlined_call_operand.vmem [shape: f32[4,20], index: 19, kind: input, shape index: {}]
  %s20 = inlined_call_operand.hbm [shape: f32[20,32], index: 20, kind: output, shape index: {0}]
  %s21 = inlined_call_operand.hbm [shape: f32[4,20], index: 21, kind: output, shape index: {1}]
  %s22 = inlined_call_operand.hbm [shape: f32[4,32], index: 22, kind: output, shape index: {2}]
  %23 = xla_tuple %s20, %s21, %s22
  %s24 = sld [smem:[#allocation0]]
  $region122: #{tpu_custom_call.1} parent=0
    _
  %s26 = ssub.s32 1, %s24
  %s27 = scalar_select 0, %s26, %s24
  $region1: #{tpu_custom_call.1} parent=0
    #allocation2 [shape = 'u8[8192]{0}', space=vmem, size = 0x2000, scoped, tag = 'input window, operand 2, single buffered']
    #allocation3 [shape = 's32[1]{0}', space=sflag, size = 0x4, scoped, tag = 'scoped memory for tpu_custom_call.1']
    #allocation4 [shape = 's32[1]{0}', space=sflag, size = 0x4, scoped, tag = 'scoped memory for tpu_custom_call.1']
    #allocation5 [shape = 'u8[16384]{0}', space=vmem, size = 0x4000, scoped, tag = 'input window, operand 8, single buffered']
    #allocation6 [shape = 's32[1]{0}', space=sflag, size = 0x4, scoped, tag = 'scoped memory for tpu_custom_call.1']
    #allocation7 [shape = 'u8[16384]{0}', space=vmem, size = 0x4000, scoped, tag = 'input window, operand 10, single buffered']
    #allocation8 [shape = 'u8[16384]{0}', space=vmem, size = 0x4000, scoped, tag = 'input window, operand 14, single buffered']
    #allocation9 [shape = 's32[1]{0}', space=sflag, size = 0x4, scoped, tag = 'scoped memory for tpu_custom_call.1']
    #allocation10 [shape = 'u8[12288]{0}', space=vmem, size = 0x3000, scoped, tag = 'output window, operand 0, single buffered']
    #allocation11 [shape = 'u8[2048]{0}', space=vmem, size = 0x800, scoped, tag = 'output window, operand 1, single buffered']
    #allocation12 [shape = 's32[1]{0}', space=sflag, size = 0x4, scoped, tag = 'scoped memory for tpu_custom_call.1']
    #allocation13 [shape = 'u8[2048]{0}', space=vmem, size = 0x800, scoped, tag = 'output window, operand 2, single buffered']
    %28 = vsyncpa [#allocation3], 0
    %29 = vsyncpa [#allocation6], 0
    %30 = vsyncpa [#allocation9], 0
    %31 = vsyncpa [#allocation4], 0
    %32 = vsyncpa [#allocation12], 0
    // Predicated region
    $region2: #{tpu_custom_call.1} parent=1 // pred_check
      _
    $region3: #{tpu_custom_call.1} parent=1 // pred_check_branch
      %34 = sbr.rel (0) target = $region5
    $region4: #{tpu_custom_call.1} parent=1 // pred_region
      _
    $region5: #{tpu_custom_call.1} parent=1 // pred_fallthru
      _
    // Predicated region
    $region6: #{tpu_custom_call.1} parent=1 // pred_check
      _
    $region7: #{tpu_custom_call.1} parent=1 // pred_check_branch
      %36 = sbr.rel (0) target = $region9
    $region8: #{tpu_custom_call.1} parent=1 // pred_region
      _
    $region9: #{tpu_custom_call.1} parent=1 // pred_fallthru
      _
    // Predicated region
    $region10: #{tpu_custom_call.1} parent=1 // pred_check
      _
    $region11: #{tpu_custom_call.1} parent=1 // pred_check_branch
      %38 = sbr.rel (0) target = $region13
    $region12: #{tpu_custom_call.1} parent=1 // pred_region
      %40 = vsyncadd [#allocation3], 0
      %s41 = sshll.u32 %s2, 4
      %s42 = int_to_ptr.hbm [resolvable:$true] %s41
      %s43 = sshll.u32 [#allocation2], 4
      %s44 = int_to_ptr.vmem [resolvable:$true] %s43
      %49 = dma.hbm_to_vmem [thread:$0]  %s42, 256, %s44, [#allocation3], 128, 128, 8
    $region13: #{tpu_custom_call.1} parent=1 // pred_fallthru
      _
    // Predicated region
    $region14: #{tpu_custom_call.1} parent=1 // pred_check
      _
    $region15: #{tpu_custom_call.1} parent=1 // pred_check_branch
      %51 = sbr.rel (0) target = $region17
    $region16: #{tpu_custom_call.1} parent=1 // pred_region
      _
    $region17: #{tpu_custom_call.1} parent=1 // pred_fallthru
      _
    // Predicated region
    $region18: #{tpu_custom_call.1} parent=1 // pred_check
      _
    $region19: #{tpu_custom_call.1} parent=1 // pred_check_branch
      %53 = sbr.rel (0) target = $region21
    $region20: #{tpu_custom_call.1} parent=1 // pred_region
      _
    $region21: #{tpu_custom_call.1} parent=1 // pred_fallthru
      _
    // Predicated region
    $region22: #{tpu_custom_call.1} parent=1 // pred_check
      _
    $region23: #{tpu_custom_call.1} parent=1 // pred_check_branch
      %55 = sbr.rel (0) target = $region25
    $region24: #{tpu_custom_call.1} parent=1 // pred_region
      _
    $region25: #{tpu_custom_call.1} parent=1 // pred_fallthru
      _
    // Predicated region
    $region26: #{tpu_custom_call.1} parent=1 // pred_check
      _
    $region27: #{tpu_custom_call.1} parent=1 // pred_check_branch
      %57 = sbr.rel (0) target = $region29
    $region28: #{tpu_custom_call.1} parent=1 // pred_region
      _
    $region29: #{tpu_custom_call.1} parent=1 // pred_fallthru
      _
    // Predicated region
    $region30: #{tpu_custom_call.1} parent=1 // pred_check
      _
    $region31: #{tpu_custom_call.1} parent=1 // pred_check_branch
      %59 = sbr.rel (0) target = $region33
    $region32: #{tpu_custom_call.1} parent=1 // pred_region
      _
    $region33: #{tpu_custom_call.1} parent=1 // pred_fallthru
      _
    // Predicated region
    $region34: #{tpu_custom_call.1} parent=1 // pred_check
      _
    $region35: #{tpu_custom_call.1} parent=1 // pred_check_branch
      %61 = sbr.rel (0) target = $region37
    $region36: #{tpu_custom_call.1} parent=1 // pred_region
      %63 = vsyncadd [#allocation6], 0
      %s64 = sshll.u32 %s8, 4
      %s65 = int_to_ptr.hbm [resolvable:$true] %s64
      %s66 = sshll.u32 [#allocation5], 4
      %s67 = int_to_ptr.vmem [resolvable:$true] %s66
      %72 = dma.hbm_to_vmem [thread:$0]  %s65, 512, %s67, [#allocation6], 128, 128, 8
    $region37: #{tpu_custom_call.1} parent=1 // pred_fallthru
      _
    // Predicated region
    $region38: #{tpu_custom_call.1} parent=1 // pred_check
      _
    $region39: #{tpu_custom_call.1} parent=1 // pred_check_branch
      %74 = sbr.rel (0) target = $region41
    $region40: #{tpu_custom_call.1} parent=1 // pred_region
      _
    $region41: #{tpu_custom_call.1} parent=1 // pred_fallthru
      _
    // Predicated region
    $region42: #{tpu_custom_call.1} parent=1 // pred_check
      _
    $region43: #{tpu_custom_call.1} parent=1 // pred_check_branch
      %76 = sbr.rel (0) target = $region45
    $region44: #{tpu_custom_call.1} parent=1 // pred_region
      %78 = vsyncadd [#allocation6], 0
      %s79 = sshll.u32 %s10, 4
      %s80 = int_to_ptr.hbm [resolvable:$true] %s79
      %s81 = sshll.u32 [#allocation7], 4
      %s82 = int_to_ptr.vmem [resolvable:$true] %s81
      %87 = dma.hbm_to_vmem [thread:$0]  %s80, 512, %s82, [#allocation6], 128, 128, 8
    $region45: #{tpu_custom_call.1} parent=1 // pred_fallthru
      _
    // Predicated region
    $region46: #{tpu_custom_call.1} parent=1 // pred_check
      _
    $region47: #{tpu_custom_call.1} parent=1 // pred_check_branch
      %89 = sbr.rel (0) target = $region49
    $region48: #{tpu_custom_call.1} parent=1 // pred_region
      _
    $region49: #{tpu_custom_call.1} parent=1 // pred_fallthru
      _
    // Predicated region
    $region50: #{tpu_custom_call.1} parent=1 // pred_check
      _
    $region51: #{tpu_custom_call.1} parent=1 // pred_check_branch
      %91 = sbr.rel (0) target = $region53
    $region52: #{tpu_custom_call.1} parent=1 // pred_region
      _
    $region53: #{tpu_custom_call.1} parent=1 // pred_fallthru
      _
    // Predicated region
    $region54: #{tpu_custom_call.1} parent=1 // pred_check
      _
    $region55: #{tpu_custom_call.1} parent=1 // pred_check_branch
      %93 = sbr.rel (0) target = $region57
    $region56: #{tpu_custom_call.1} parent=1 // pred_region
      _
    $region57: #{tpu_custom_call.1} parent=1 // pred_fallthru
      _
    // Predicated region
    $region58: #{tpu_custom_call.1} parent=1 // pred_check
      _
    $region59: #{tpu_custom_call.1} parent=1 // pred_check_branch
      %95 = sbr.rel (0) target = $region61
    $region60: #{tpu_custom_call.1} parent=1 // pred_region
      %97 = vsyncadd [#allocation9], 0
      %s98 = sshll.u32 %s14, 4
      %s99 = int_to_ptr.hbm [resolvable:$true] %s98
      %s100 = sshll.u32 [#allocation8], 4
      %s101 = int_to_ptr.vmem [resolvable:$true] %s100
      %106 = dma.hbm_to_vmem [thread:$0]  %s99, 512, %s101, [#allocation9], 128, 128, 8
    $region61: #{tpu_custom_call.1} parent=1 // pred_fallthru
      _
    // Predicated region
    $region62: #{tpu_custom_call.1} parent=1 // pred_check
      _
    $region63: #{tpu_custom_call.1} parent=1 // pred_check_branch
      %108 = sbr.rel (0) target = $region65
    $region64: #{tpu_custom_call.1} parent=1 // pred_region
      _
    $region65: #{tpu_custom_call.1} parent=1 // pred_fallthru
      _
    // Predicated region
    $region66: #{tpu_custom_call.1} parent=1 // pred_check
      _
    $region67: #{tpu_custom_call.1} parent=1 // pred_check_branch
      %110 = sbr.rel (0) target = $region69
    $region68: #{tpu_custom_call.1} parent=1 // pred_region
      _
    $region69: #{tpu_custom_call.1} parent=1 // pred_fallthru
      _
    // Predicated region
    $region70: #{tpu_custom_call.1} parent=1 // pred_check
      _
    $region71: #{tpu_custom_call.1} parent=1 // pred_check_branch
      %112 = sbr.rel (0) target = $region73
    $region72: #{tpu_custom_call.1} parent=1 // pred_region
      _
    $region73: #{tpu_custom_call.1} parent=1 // pred_fallthru
      _
    // Predicated region
    $region74: #{tpu_custom_call.1} parent=1 // pred_check
      _
    $region75: #{tpu_custom_call.1} parent=1 // pred_check_branch
      %114 = sbr.rel (0) target = $region77
    $region76: #{tpu_custom_call.1} parent=1 // pred_region
      _
    $region77: #{tpu_custom_call.1} parent=1 // pred_fallthru
      _
    // Predicated region
    $region78: #{tpu_custom_call.1} parent=1 // pred_check
      _
    $region79: #{tpu_custom_call.1} parent=1 // pred_check_branch
      %116 = sbr.rel (0) target = $region81
    $region80: #{tpu_custom_call.1} parent=1 // pred_region
      _
    $region81: #{tpu_custom_call.1} parent=1 // pred_fallthru
      _
    // Predicated region
    $region82: #{tpu_custom_call.1} parent=1 // pred_check
      _
    $region83: #{tpu_custom_call.1} parent=1 // pred_check_branch
      %118 = sbr.rel (0) target = $region85
    $region84: #{tpu_custom_call.1} parent=1 // pred_region
      %120 = dma.done [#allocation3], 256
    $region85: #{tpu_custom_call.1} parent=1 // pred_fallthru
      _
    // Predicated region
    $region86: #{tpu_custom_call.1} parent=1 // pred_check
      _
    $region87: #{tpu_custom_call.1} parent=1 // pred_check_branch
      %122 = sbr.rel (0) target = $region89
    $region88: #{tpu_custom_call.1} parent=1 // pred_region
      %124 = dma.done [#allocation6], 512
    $region89: #{tpu_custom_call.1} parent=1 // pred_fallthru
      _
    // Predicated region
    $region90: #{tpu_custom_call.1} parent=1 // pred_check
      _
    $region91: #{tpu_custom_call.1} parent=1 // pred_check_branch
      %126 = sbr.rel (0) target = $region93
    $region92: #{tpu_custom_call.1} parent=1 // pred_region
      %128 = dma.done [#allocation6], 512
    $region93: #{tpu_custom_call.1} parent=1 // pred_fallthru
      _
    // Predicated region
    $region94: #{tpu_custom_call.1} parent=1 // pred_check
      _
    $region95: #{tpu_custom_call.1} parent=1 // pred_check_branch
      %130 = sbr.rel (0) target = $region97
    $region96: #{tpu_custom_call.1} parent=1 // pred_region
      %132 = dma.done [#allocation9], 512
    $region97: #{tpu_custom_call.1} parent=1 // pred_fallthru
      _
    %v133 = vld [vmem:[%s0] sm:$0xff]
    %v134 = vld [vmem:[%s0 + $0x8] sm:$0xff]
    %v135 = vld [vmem:[%s0 + $0x10] sm:$0xf]
    %v136 = vld [vmem:[#allocation2] sm:$0xff]
    %v137 = vld [vmem:[#allocation2 + $0x8] sm:$0x1]
    %vm138 = vcmask 72704
    %v140 = vsel %vm138, %v133, 0
    %v143 = vsel %vm138, %v134, 0
    %v146 = vsel %vm138, %v135, 0
    %vm148 = vcmask 1040384
    %v150 = vsel %vm148, %v137, 0
    %152 = vmatpush.msra.mxu0 0.0
    %153 = vmatpush.msra.mxu0 0.0
    %154 = vmatpush.msra.mxu0 0.0
    %155 = vmatpush.msra.mxu0 0.0
    %156 = vmatpush.msra.mxu0 0.0
    %157 = vmatpush.msra.mxu0 0.0
    %158 = vmatpush.msra.mxu0 0.0
    %159 = vmatpush.msra.mxu0 0.0
    %160 = vmatpush.msra.mxu0 0.0
    %161 = vmatpush.msra.mxu0 0.0
    %162 = vmatpush.msra.mxu0 0.0
    %163 = vmatpush.msra.mxu0 0.0
    %164 = vmatpush.msra.mxu0 0.0
    %165 = vmatpush.msra.mxu0 0.0
    %166 = vmatpush.msra.mxu0 %v150
    %167 = vmatpush.msra.mxu0 %v136
    %168 = vmatmul.f32.gmra.mxu0 %v140
    %v169 = vpop.f32.mrf.mxu0
    %v170 = vadd.f32 0.0, %v169
    %171 = vmatmul.f32.gmra.mxu0 %v143
    %v172 = vpop.f32.mrf.mxu0
    %v173 = vadd.f32 0.0, %v172
    %174 = vmatmul.f32.gmra.mxu0 %v146
    %v175 = vpop.f32.mrf.mxu0
    %v176 = vadd.f32 0.0, %v175
    %177 = vdwg.mxu0
    %v178 = vld [vmem:[%s3] sm:$0xff]
    %v179 = vld [vmem:[%s3 + $0x8] sm:$0xff]
    %v180 = vld [vmem:[%s3 + $0x10] sm:$0xff]
    %v181 = vld [vmem:[%s3 + $0x18] sm:$0xff]
    %v182 = vld [vmem:[%s1] sm:$0xff]
    %v183 = vld [vmem:[%s1 + $0x8] sm:$0x1]
    %v185 = vsel %vm138, %v178, 0
    %v188 = vsel %vm138, %v179, 0
    %v191 = vsel %vm138, %v180, 0
    %v194 = vsel %vm138, %v181, 0
    %v197 = vsel %vm148, %v183, 0
    %199 = vmatpush.msra.mxu0 0.0
    %200 = vmatpush.msra.mxu0 0.0
    %201 = vmatpush.msra.mxu0 0.0
    %202 = vmatpush.msra.mxu0 0.0
    %203 = vmatpush.msra.mxu0 0.0
    %204 = vmatpush.msra.mxu0 0.0
    %205 = vmatpush.msra.mxu0 0.0
    %206 = vmatpush.msra.mxu0 0.0
    %207 = vmatpush.msra.mxu0 0.0
    %208 = vmatpush.msra.mxu0 0.0
    %209 = vmatpush.msra.mxu0 0.0
    %210 = vmatpush.msra.mxu0 0.0
    %211 = vmatpush.msra.mxu0 0.0
    %212 = vmatpush.msra.mxu0 0.0
    %213 = vmatpush.msra.mxu0 %v197
    %214 = vmatpush.msra.mxu0 %v182
    %215 = vmatmul.f32.gmra.mxu0 %v185
    %v216 = vpop.f32.mrf.mxu0
    %v217 = vadd.f32 0.0, %v216
    %218 = vmatmul.f32.gmra.mxu0 %v188
    %v219 = vpop.f32.mrf.mxu0
    %v220 = vadd.f32 0.0, %v219
    %221 = vmatmul.f32.gmra.mxu0 %v191
    %v222 = vpop.f32.mrf.mxu0
    %v223 = vadd.f32 0.0, %v222
    %224 = vmatmul.f32.gmra.mxu0 %v194
    %v225 = vpop.f32.mrf.mxu0
    %v226 = vadd.f32 0.0, %v225
    %227 = vdwg.mxu0
    %v228 = vld [vmem:[%s4] sm:$0xff]
    %v229 = vld [vmem:[%s4 + $0x8] sm:$0xff]
    %v230 = vld [vmem:[%s4 + $0x10] sm:$0xff]
    %v231 = vld [vmem:[%s4 + $0x18] sm:$0xff]
    %vm232 = vcmask 261120
    %v234 = vsel %vm232, %v228, 0
    %v237 = vsel %vm232, %v229, 0
    %v240 = vsel %vm232, %v230, 0
    %v243 = vsel %vm232, %v231, 0
    %245 = vmatpush.msra.mxu0 0.0
    %246 = vmatpush.msra.mxu0 0.0
    %247 = vmatpush.msra.mxu0 0.0
    %248 = vmatpush.msra.mxu0 0.0
    %249 = vmatpush.msra.mxu0 0.0
    %250 = vmatpush.msra.mxu0 0.0
    %251 = vmatpush.msra.mxu0 0.0
    %252 = vmatpush.msra.mxu0 0.0
    %253 = vmatpush.msra.mxu0 0.0
    %254 = vmatpush.msra.mxu0 0.0
    %255 = vmatpush.msra.mxu0 0.0
    %256 = vmatpush.msra.mxu0 0.0
    %257 = vmatpush.msra.mxu0 %v226
    %258 = vmatpush.msra.mxu0 %v223
    %259 = vmatpush.msra.mxu0 %v220
    %260 = vmatpush.msra.mxu0 %v217
    %261 = vmatmul.f32.gmra.mxu0 %v234
    %v262 = vpop.f32.mrf.mxu0
    %v263 = vadd.f32 0.0, %v262
    %264 = vmatmul.f32.gmra.mxu0 %v237
    %v265 = vpop.f32.mrf.mxu0
    %v266 = vadd.f32 0.0, %v265
    %267 = vmatmul.f32.gmra.mxu0 %v240
    %v268 = vpop.f32.mrf.mxu0
    %v269 = vadd.f32 0.0, %v268
    %270 = vmatmul.f32.gmra.mxu0 %v243
    %v271 = vpop.f32.mrf.mxu0
    %v272 = vadd.f32 0.0, %v271
    %273 = vdwg.mxu0
    %v274 = vld [vmem:[%s6] sm:$0xff]
    %v275 = vld [vmem:[%s6 + $0x8] sm:$0xff]
    %v276 = vld [vmem:[%s6 + $0x10] sm:$0xff]
    %v277 = vld [vmem:[%s6 + $0x18] sm:$0xff]
    %v279 = vsel %vm232, %v274, 0
    %v282 = vsel %vm232, %v275, 0
    %v285 = vsel %vm232, %v276, 0
    %v288 = vsel %vm232, %v277, 0
    %290 = vmatpush.msra.mxu0 0.0
    %291 = vmatpush.msra.mxu0 0.0
    %292 = vmatpush.msra.mxu0 0.0
    %293 = vmatpush.msra.mxu0 0.0
    %294 = vmatpush.msra.mxu0 0.0
    %295 = vmatpush.msra.mxu0 0.0
    %296 = vmatpush.msra.mxu0 0.0
    %297 = vmatpush.msra.mxu0 0.0
    %298 = vmatpush.msra.mxu0 0.0
    %299 = vmatpush.msra.mxu0 0.0
    %300 = vmatpush.msra.mxu0 0.0
    %301 = vmatpush.msra.mxu0 0.0
    %302 = vmatpush.msra.mxu0 %v226
    %303 = vmatpush.msra.mxu0 %v223
    %304 = vmatpush.msra.mxu0 %v220
    %305 = vmatpush.msra.mxu0 %v217
    %306 = vmatmul.f32.gmra.mxu0 %v279
    %v307 = vpop.f32.mrf.mxu0
    %v308 = vadd.f32 0.0, %v307
    %309 = vmatmul.f32.gmra.mxu0 %v282
    %v310 = vpop.f32.mrf.mxu0
    %v311 = vadd.f32 0.0, %v310
    %312 = vmatmul.f32.gmra.mxu0 %v285
    %v313 = vpop.f32.mrf.mxu0
    %v314 = vadd.f32 0.0, %v313
    %315 = vmatmul.f32.gmra.mxu0 %v288
    %v316 = vpop.f32.mrf.mxu0
    %v317 = vadd.f32 0.0, %v316
    %318 = vdwg.mxu0
    %v319 = vld [vmem:[%s5] sm:$0xff]
    %v320 = vld [vmem:[%s5 + $0x8] sm:$0xff]
    %v321 = vld [vmem:[%s5 + $0x10] sm:$0xff]
    %v322 = vld [vmem:[%s5 + $0x18] sm:$0xff]
    %v324 = vsel %vm232, %v170, 0
    %v327 = vsel %vm232, %v173, 0
    %v330 = vsel %vm232, %v176, 0
    %332 = vmatpush.msra.mxu0 0.0
    %333 = vmatpush.msra.mxu0 0.0
    %334 = vmatpush.msra.mxu0 0.0
    %335 = vmatpush.msra.mxu0 0.0
    %336 = vmatpush.msra.mxu0 0.0
    %337 = vmatpush.msra.mxu0 0.0
    %338 = vmatpush.msra.mxu0 0.0
    %339 = vmatpush.msra.mxu0 0.0
    %340 = vmatpush.msra.mxu0 0.0
    %341 = vmatpush.msra.mxu0 0.0
    %342 = vmatpush.msra.mxu0 0.0
    %343 = vmatpush.msra.mxu0 0.0
    %344 = vmatpush.msra.mxu0 %v322
    %345 = vmatpush.msra.mxu0 %v321
    %346 = vmatpush.msra.mxu0 %v320
    %347 = vmatpush.msra.mxu0 %v319
    %348 = vmatmul.f32.gmra.mxu0 %v324
    %v349 = vpop.f32.mrf.mxu0
    %v350 = vadd.f32 0.0, %v349
    %351 = vmatmul.f32.gmra.mxu0 %v327
    %v352 = vpop.f32.mrf.mxu0
    %v353 = vadd.f32 0.0, %v352
    %354 = vmatmul.f32.gmra.mxu0 %v330
    %v355 = vpop.f32.mrf.mxu0
    %v356 = vadd.f32 0.0, %v355
    %357 = vdwg.mxu0
    %v358 = vld [vmem:[%s11] sm:$0xf]
    %vm359 = vcmask 162816
    %v361 = vsel %vm359, %v358, 0
    %vm363 = vcmask 1043456
    %v364 = vsel %vm363, %v176, 0
    %366 = vmatpush.msra.mxu0 0.0
    %367 = vmatpush.msra.mxu0 0.0
    %368 = vmatpush.msra.mxu0 0.0
    %369 = vmatpush.msra.mxu0 0.0
    %370 = vmatpush.msra.mxu0 0.0
    %371 = vmatpush.msra.mxu0 0.0
    %372 = vmatpush.msra.mxu0 0.0
    %373 = vmatpush.msra.mxu0 0.0
    %374 = vmatpush.msra.mxu0 0.0
    %375 = vmatpush.msra.mxu0 0.0
    %376 = vmatpush.msra.mxu0 0.0
    %377 = vmatpush.msra.mxu0 0.0
    %378 = vmatpush.msra.mxu0 0.0
    %379 = vmatpush.msra.mxu0 %v364
    %380 = vmatpush.msra.mxu0 %v173
    %381 = vmatpush.msra.mxu0 %v170
    %382 = vmatmul.f32.gmra.mxu0 %v361
    %v383 = vpop.f32.mrf.mxu0
    %v384 = vadd.f32 0.0, %v383
    %385 = vdwg.mxu0
    %v386 = vld [vmem:[%s7] sm:$0xff]
    %v387 = vld [vmem:[%s7 + $0x8] sm:$0xff]
    %v388 = vld [vmem:[%s7 + $0x10] sm:$0xff]
    %v389 = vld [vmem:[%s7 + $0x18] sm:$0xff]
    %v390 = vld [vmem:[%s16] sm:$0xf]
    %v391 = vld [vmem:[%s15] sm:$0x1]
    %393 = vset.pattern.permute.xlu0 0
    %394 = vperm.xlu0 %393, %v390
    %v395 = vpop.permute.xlu0 %394
    %v398 = vperm.slane %v391, 0
    %vm400 = vcmp.eq.f32.partialorder %v395, %v398
    %v401 = vsel %vm400, 1, 0
    %v402 = vcvt.s32.f32 %v401
    %v404 = vsel %vm359, %v402, 0
    %406 = vmatpush.msra.mxu0 0.0
    %407 = vmatpush.msra.mxu0 0.0
    %408 = vmatpush.msra.mxu0 0.0
    %409 = vmatpush.msra.mxu0 0.0
    %410 = vmatpush.msra.mxu0 0.0
    %411 = vmatpush.msra.mxu0 0.0
    %412 = vmatpush.msra.mxu0 0.0
    %413 = vmatpush.msra.mxu0 0.0
    %414 = vmatpush.msra.mxu0 0.0
    %415 = vmatpush.msra.mxu0 0.0
    %416 = vmatpush.msra.mxu0 0.0
    %417 = vmatpush.msra.mxu0 0.0
    %418 = vmatpush.msra.mxu0 0.0
    %419 = vmatpush.msra.mxu0 %v364
    %420 = vmatpush.msra.mxu0 %v173
    %421 = vmatpush.msra.mxu0 %v170
    %422 = vmatmul.f32.gmra.mxu0 %v404
    %v423 = vpop.f32.mrf.mxu0
    %v424 = vadd.f32 0.0, %v423
    %425 = vdwg.mxu0
    %v426 = vld [vmem:[#allocation5] sm:$0xff]
    %v427 = vld [vmem:[#allocation5 + $0x8] sm:$0xff]
    %v428 = vld [vmem:[#allocation5 + $0x10] sm:$0xff]
    %v429 = vld [vmem:[#allocation5 + $0x18] sm:$0xff]
    %v431 = vsel %vm232, %v424, 0
    %433 = vmatpush.msra.mxu0 0.0
    %434 = vmatpush.msra.mxu0 0.0
    %435 = vmatpush.msra.mxu0 0.0
    %436 = vmatpush.msra.mxu0 0.0
    %437 = vmatpush.msra.mxu0 0.0
    %438 = vmatpush.msra.mxu0 0.0
    %439 = vmatpush.msra.mxu0 0.0
    %440 = vmatpush.msra.mxu0 0.0
    %441 = vmatpush.msra.mxu0 0.0
    %442 = vmatpush.msra.mxu0 0.0
    %443 = vmatpush.msra.mxu0 0.0
    %444 = vmatpush.msra.mxu0 0.0
    %445 = vmatpush.msra.mxu0 %v429
    %446 = vmatpush.msra.mxu0 %v428
    %447 = vmatpush.msra.mxu0 %v427
    %448 = vmatpush.msra.mxu0 %v426
    %449 = vmatmul.f32.gmra.mxu0 %v431
    %v450 = vpop.f32.mrf.mxu0
    %v451 = vadd.f32 0.0, %v450
    %452 = vdwg.mxu0
    %v454 = vsel %vm232, %v384, 0
    %456 = vmatpush.msra.mxu0 0.0
    %457 = vmatpush.msra.mxu0 0.0
    %458 = vmatpush.msra.mxu0 0.0
    %459 = vmatpush.msra.mxu0 0.0
    %460 = vmatpush.msra.mxu0 0.0
    %461 = vmatpush.msra.mxu0 0.0
    %462 = vmatpush.msra.mxu0 0.0
    %463 = vmatpush.msra.mxu0 0.0
    %464 = vmatpush.msra.mxu0 0.0
    %465 = vmatpush.msra.mxu0 0.0
    %466 = vmatpush.msra.mxu0 0.0
    %467 = vmatpush.msra.mxu0 0.0
    %468 = vmatpush.msra.mxu0 %v389
    %469 = vmatpush.msra.mxu0 %v388
    %470 = vmatpush.msra.mxu0 %v387
    %471 = vmatpush.msra.mxu0 %v386
    %472 = vmatmul.f32.gmra.mxu0 %v454
    %v473 = vpop.f32.mrf.mxu0
    %v474 = vadd.f32 %v451, %v473
    %475 = vdwg.mxu0
    %v476 = vld [vmem:[%s17] sm:$0xf]
    %v477 = vld [vmem:[%s9] sm:$0x1]
    %479 = vset.pattern.permute.xlu0 0
    %480 = vperm.xlu0 %479, %v476
    %v481 = vpop.permute.xlu0 %480
    %v484 = vperm.slane %v477, 0
    %v486 = vmul.f32 %v481, %v484
    %v487 = vadd.f32 %v474, %v486
    %v488 = vld [vmem:[%s12] sm:$0xff]
    %v489 = vld [vmem:[%s12 + $0x8] sm:$0xff]
    %v490 = vld [vmem:[%s12 + $0x10] sm:$0xff]
    %v491 = vld [vmem:[%s12 + $0x18] sm:$0xff]
    %vm492 = vcmask 31744
    %v494 = vsel %vm492, %v488, 0
    %v497 = vsel %vm492, %v489, 0
    %v500 = vsel %vm492, %v490, 0
    %v503 = vsel %vm492, %v491, 0
    %v506 = vsel %vm363, %v487, 0
    %508 = vmatpush.msra.mxu0 0.0
    %509 = vmatpush.msra.mxu0 0.0
    %510 = vmatpush.msra.mxu0 0.0
    %511 = vmatpush.msra.mxu0 0.0
    %512 = vmatpush.msra.mxu0 0.0
    %513 = vmatpush.msra.mxu0 0.0
    %514 = vmatpush.msra.mxu0 0.0
    %515 = vmatpush.msra.mxu0 0.0
    %516 = vmatpush.msra.mxu0 0.0
    %517 = vmatpush.msra.mxu0 0.0
    %518 = vmatpush.msra.mxu0 0.0
    %519 = vmatpush.msra.mxu0 0.0
    %520 = vmatpush.msra.mxu0 0.0
    %521 = vmatpush.msra.mxu0 0.0
    %522 = vmatpush.msra.mxu0 0.0
    %523 = vmatpush.msra.mxu0 %v506
    %524 = vmatmul.f32.gmra.mxu0 %v494
    %v525 = vpop.f32.mrf.mxu0
    %v526 = vadd.f32 0.0, %v525
    %527 = vmatmul.f32.gmra.mxu0 %v497
    %v528 = vpop.f32.mrf.mxu0
    %v529 = vadd.f32 0.0, %v528
    %530 = vmatmul.f32.gmra.mxu0 %v500
    %v531 = vpop.f32.mrf.mxu0
    %v532 = vadd.f32 0.0, %v531
    %533 = vmatmul.f32.gmra.mxu0 %v503
    %v534 = vpop.f32.mrf.mxu0
    %v535 = vadd.f32 0.0, %v534
    %536 = vdwg.mxu0
    %v537 = vld [vmem:[#allocation8] sm:$0xff]
    %v538 = vld [vmem:[#allocation8 + $0x8] sm:$0xff]
    %v539 = vld [vmem:[#allocation8 + $0x10] sm:$0xff]
    %v540 = vld [vmem:[#allocation8 + $0x18] sm:$0xff]
    %v541 = vmul.f32 %v526, %v537
    %v542 = vmul.f32 %v529, %v538
    %v543 = vmul.f32 %v532, %v539
    %v544 = vmul.f32 %v535, %v540
    %v546 = vsel %vm232, %v541, 0
    %v549 = vsel %vm232, %v542, 0
    %v552 = vsel %vm232, %v543, 0
    %v555 = vsel %vm232, %v544, 0
    %557 = vmatpush.msra.mxu0 0.0
    %558 = vmatpush.msra.mxu0 0.0
    %559 = vmatpush.msra.mxu0 0.0
    %560 = vmatpush.msra.mxu0 0.0
    %561 = vmatpush.msra.mxu0 0.0
    %562 = vmatpush.msra.mxu0 0.0
    %563 = vmatpush.msra.mxu0 0.0
    %564 = vmatpush.msra.mxu0 0.0
    %565 = vmatpush.msra.mxu0 0.0
    %566 = vmatpush.msra.mxu0 0.0
    %567 = vmatpush.msra.mxu0 0.0
    %568 = vmatpush.msra.mxu0 0.0
    %569 = vmatpush.msra.mxu0 %v272
    %570 = vmatpush.msra.mxu0 %v269
    %571 = vmatpush.msra.mxu0 %v266
    %572 = vmatpush.msra.mxu0 %v263
    %573 = vmatmul.f32.gmra.mxu0 %v546
    %v574 = vpop.f32.mrf.mxu0
    %v575 = vadd.f32 0.0, %v574
    %576 = vmatmul.f32.gmra.mxu0 %v549
    %v577 = vpop.f32.mrf.mxu0
    %v578 = vadd.f32 0.0, %v577
    %579 = vmatmul.f32.gmra.mxu0 %v552
    %v580 = vpop.f32.mrf.mxu0
    %v581 = vadd.f32 0.0, %v580
    %582 = vmatmul.f32.gmra.mxu0 %v555
    %v583 = vpop.f32.mrf.mxu0
    %v584 = vadd.f32 0.0, %v583
    %585 = vdwg.mxu0
    %v586 = vmul.f32 %v575, 0.5
    %v587 = vmul.f32 %v578, 0.5
    %v588 = vmul.f32 %v581, 0.5
    %v589 = vmul.f32 %v584, 0.5
    %v590 = vld [vmem:[%s18] sm:$0xff]
    %v591 = vld [vmem:[%s18 + $0x8] sm:$0xff]
    %v592 = vld [vmem:[%s18 + $0x10] sm:$0xff]
    %v593 = vld [vmem:[%s18 + $0x18] sm:$0xff]
    %vm594 = vcmp.gt.f32.partialorder %v590, 0.5
    %vm595 = vcmp.gt.f32.partialorder %v591, 0.5
    %vm596 = vcmp.gt.f32.partialorder %v592, 0.5
    %vm597 = vcmp.gt.f32.partialorder %v593, 0.5
    %v598 = vsel %vm594, -inf, %v586
    %v599 = vsel %vm595, -inf, %v587
    %v600 = vsel %vm596, -inf, %v588
    %v601 = vsel %vm597, -inf, %v589
    %v602 = vsel %vm359, %v598, -inf
    %603 = vmax.xlane.f32.xlu0 %v602
    %v604 = vpop.xlane.xlu0 %603
    %v605 = vsel %vm359, %v599, -inf
    %606 = vmax.xlane.f32.xlu0 %v605
    %v607 = vpop.xlane.xlu0 %606
    %v608 = vsel %vm359, %v600, -inf
    %609 = vmax.xlane.f32.xlu0 %v608
    %v610 = vpop.xlane.xlu0 %609
    %v611 = vsel %vm359, %v601, -inf
    %612 = vmax.xlane.f32.xlu0 %v611
    %v613 = vpop.xlane.xlu0 %612
    %v614 = vsub.f32 %v598, %v604
    %v615 = vsub.f32 %v599, %v607
    %v616 = vsub.f32 %v600, %v610
    %v617 = vsub.f32 %v601, %v613
    %v618 = vmul.f32 %v614, 1.442695
    %v619 = vpow.pop %v618
    %v620 = vmul.f32 %v615, 1.442695
    %v621 = vpow.pop %v620
    %v622 = vmul.f32 %v616, 1.442695
    %v623 = vpow.pop %v622
    %v624 = vmul.f32 %v617, 1.442695
    %v625 = vpow.pop %v624
    %v626 = vsel %vm359, %v619, 0.0
    %627 = vadd.xlane.f32.xlu0 %v626
    %v628 = vpop.xlane.xlu0 %627
    %v629 = vsel %vm359, %v621, 0.0
    %630 = vadd.xlane.f32.xlu0 %v629
    %v631 = vpop.xlane.xlu0 %630
    %v632 = vsel %vm359, %v623, 0.0
    %633 = vadd.xlane.f32.xlu0 %v632
    %v634 = vpop.xlane.xlu0 %633
    %v635 = vsel %vm359, %v625, 0.0
    %636 = vadd.xlane.f32.xlu0 %v635
    %v637 = vpop.xlane.xlu0 %636
    %v638 = vrcp.pop %v628
    %v639 = vmul.f32 %v628, %v638
    %v640 = vsub.f32 1.0, %v639
    %v641 = vmul.f32 %v638, %v640
    %v642 = vadd.f32 %v638, %v641
    %vm643 = vweird.f32 %v628
    %vm644 = vweird.f32 %v638
    %vm645 = vmor %vm643, %vm644
    %v646 = vsel %vm645, %v638, %v642
    %v647 = vand.u32 2147483647, %v628
    %vm648 = vcmp.eq.f32.partialorder %v647, 8.507059e+37
    %v649 = vand.u32 %v628, 2147483648
    %v650 = vor.u32 1.1754944e-38, %v649
    %v651 = vsel %vm648, %v650, %v646
    %v652 = vmul.f32 %v619, %v651
    %v653 = vrcp.pop %v631
    %v654 = vmul.f32 %v631, %v653
    %v655 = vsub.f32 1.0, %v654
    %v656 = vmul.f32 %v653, %v655
    %v657 = vadd.f32 %v653, %v656
    %vm658 = vweird.f32 %v631
    %vm659 = vweird.f32 %v653
    %vm660 = vmor %vm658, %vm659
    %v661 = vsel %vm660, %v653, %v657
    %v662 = vand.u32 2147483647, %v631
    %vm663 = vcmp.eq.f32.partialorder %v662, 8.507059e+37
    %v664 = vand.u32 %v631, 2147483648
    %v665 = vor.u32 1.1754944e-38, %v664
    %v666 = vsel %vm663, %v665, %v661
    %v667 = vmul.f32 %v621, %v666
    %v668 = vrcp.pop %v634
    %v669 = vmul.f32 %v634, %v668
    %v670 = vsub.f32 1.0, %v669
    %v671 = vmul.f32 %v668, %v670
    %v672 = vadd.f32 %v668, %v671
    %vm673 = vweird.f32 %v634
    %vm674 = vweird.f32 %v668
    %vm675 = vmor %vm673, %vm674
    %v676 = vsel %vm675, %v668, %v672
    %v677 = vand.u32 2147483647, %v634
    %vm678 = vcmp.eq.f32.partialorder %v677, 8.507059e+37
    %v679 = vand.u32 %v634, 2147483648
    %v680 = vor.u32 1.1754944e-38, %v679
    %v681 = vsel %vm678, %v680, %v676
    %v682 = vmul.f32 %v623, %v681
    %v683 = vrcp.pop %v637
    %v684 = vmul.f32 %v637, %v683
    %v685 = vsub.f32 1.0, %v684
    %v686 = vmul.f32 %v683, %v685
    %v687 = vadd.f32 %v683, %v686
    %vm688 = vweird.f32 %v637
    %vm689 = vweird.f32 %v683
    %vm690 = vmor %vm688, %vm689
    %v691 = vsel %vm690, %v683, %v687
    %v692 = vand.u32 2147483647, %v637
    %vm693 = vcmp.eq.f32.partialorder %v692, 8.507059e+37
    %v694 = vand.u32 %v637, 2147483648
    %v695 = vor.u32 1.1754944e-38, %v694
    %v696 = vsel %vm693, %v695, %v691
    %v697 = vmul.f32 %v625, %v696
    %v699 = vsel %vm359, %v652, 0
    %v702 = vsel %vm359, %v667, 0
    %v705 = vsel %vm359, %v682, 0
    %v708 = vsel %vm359, %v697, 0
    %v711 = vsel %vm363, %v356, 0
    %713 = vmatpush.msra.mxu0 0.0
    %714 = vmatpush.msra.mxu0 0.0
    %715 = vmatpush.msra.mxu0 0.0
    %716 = vmatpush.msra.mxu0 0.0
    %717 = vmatpush.msra.mxu0 0.0
    %718 = vmatpush.msra.mxu0 0.0
    %719 = vmatpush.msra.mxu0 0.0
    %720 = vmatpush.msra.mxu0 0.0
    %721 = vmatpush.msra.mxu0 0.0
    %722 = vmatpush.msra.mxu0 0.0
    %723 = vmatpush.msra.mxu0 0.0
    %724 = vmatpush.msra.mxu0 0.0
    %725 = vmatpush.msra.mxu0 0.0
    %726 = vmatpush.msra.mxu0 %v711
    %727 = vmatpush.msra.mxu0 %v353
    %728 = vmatpush.msra.mxu0 %v350
    %729 = vmatmul.f32.gmra.mxu0 %v699
    %v730 = vpop.f32.mrf.mxu0
    %v731 = vadd.f32 0.0, %v730
    %732 = vmatmul.f32.gmra.mxu0 %v702
    %v733 = vpop.f32.mrf.mxu0
    %v734 = vadd.f32 0.0, %v733
    %735 = vmatmul.f32.gmra.mxu0 %v705
    %v736 = vpop.f32.mrf.mxu0
    %v737 = vadd.f32 0.0, %v736
    %738 = vmatmul.f32.gmra.mxu0 %v708
    %v739 = vpop.f32.mrf.mxu0
    %v740 = vadd.f32 0.0, %v739
    %741 = vdwg.mxu0
    %v742 = vld [vmem:[%s13] sm:$0xf]
    %v743 = vmul.f32 %v731, %v537
    %v744 = vmul.f32 %v734, %v538
    %v745 = vmul.f32 %v737, %v539
    %v746 = vmul.f32 %v740, %v540
    %v748 = vsel %vm232, %v742, 0
    %750 = vmatpush.msra.mxu0 0.0
    %751 = vmatpush.msra.mxu0 0.0
    %752 = vmatpush.msra.mxu0 0.0
    %753 = vmatpush.msra.mxu0 0.0
    %754 = vmatpush.msra.mxu0 0.0
    %755 = vmatpush.msra.mxu0 0.0
    %756 = vmatpush.msra.mxu0 0.0
    %757 = vmatpush.msra.mxu0 0.0
    %758 = vmatpush.msra.mxu0 0.0
    %759 = vmatpush.msra.mxu0 0.0
    %760 = vmatpush.msra.mxu0 0.0
    %761 = vmatpush.msra.mxu0 0.0
    %762 = vmatpush.msra.mxu0 %v746
    %763 = vmatpush.msra.mxu0 %v745
    %764 = vmatpush.msra.mxu0 %v744
    %765 = vmatpush.msra.mxu0 %v743
    %766 = vmatmul.f32.gmra.mxu0 %v748
    %v767 = vpop.f32.mrf.mxu0
    %v768 = vadd.f32 0.0, %v767
    %769 = vdwg.mxu0
    %v770 = vld [vmem:[#allocation7] sm:$0xff]
    %v771 = vld [vmem:[#allocation7 + $0x8] sm:$0xff]
    %v772 = vld [vmem:[#allocation7 + $0x10] sm:$0xff]
    %v773 = vld [vmem:[#allocation7 + $0x18] sm:$0xff]
    %v775 = vsel %vm232, %v768, 0
    %777 = vmatpush.msra.mxu0 0.0
    %778 = vmatpush.msra.mxu0 0.0
    %779 = vmatpush.msra.mxu0 0.0
    %780 = vmatpush.msra.mxu0 0.0
    %781 = vmatpush.msra.mxu0 0.0
    %782 = vmatpush.msra.mxu0 0.0
    %783 = vmatpush.msra.mxu0 0.0
    %784 = vmatpush.msra.mxu0 0.0
    %785 = vmatpush.msra.mxu0 0.0
    %786 = vmatpush.msra.mxu0 0.0
    %787 = vmatpush.msra.mxu0 0.0
    %788 = vmatpush.msra.mxu0 0.0
    %789 = vmatpush.msra.mxu0 %v773
    %790 = vmatpush.msra.mxu0 %v772
    %791 = vmatpush.msra.mxu0 %v771
    %792 = vmatpush.msra.mxu0 %v770
    %793 = vmatmul.f32.gmra.mxu0 %v775
    %v794 = vpop.f32.mrf.mxu0
    %v795 = vadd.f32 0.0, %v794
    %796 = vdwg.mxu0
    %v798 = vsel %vm232, %v795, 0
    %800 = vmatpush.msra.mxu0 0.0
    %801 = vmatpush.msra.mxu0 0.0
    %802 = vmatpush.msra.mxu0 0.0
    %803 = vmatpush.msra.mxu0 0.0
    %804 = vmatpush.msra.mxu0 0.0
    %805 = vmatpush.msra.mxu0 0.0
    %806 = vmatpush.msra.mxu0 0.0
    %807 = vmatpush.msra.mxu0 0.0
    %808 = vmatpush.msra.mxu0 0.0
    %809 = vmatpush.msra.mxu0 0.0
    %810 = vmatpush.msra.mxu0 0.0
    %811 = vmatpush.msra.mxu0 0.0
    %812 = vmatpush.msra.mxu0 %v317
    %813 = vmatpush.msra.mxu0 %v314
    %814 = vmatpush.msra.mxu0 %v311
    %815 = vmatpush.msra.mxu0 %v308
    %816 = vmatmul.f32.gmra.mxu0 %v798
    %v817 = vpop.f32.mrf.mxu0
    %v818 = vadd.f32 0.0, %v817
    %819 = vdwg.mxu0
    %v820 = vmul.f32 %v818, 0.17677669
    %v821 = vtanh.pop %v820
    %v822 = vmul.f32 %v821, 10.0
    %v823 = vld [vmem:[%s19] sm:$0xf]
    %vm824 = vcmp.gt.f32.partialorder %v823, 0.5
    %v825 = vsel %vm824, -inf, %v822
    %vm826 = vcmask 158720
    %v827 = vsel %vm826, %v825, -inf
    %828 = vmax.xlane.f32.xlu0 %v827
    %v829 = vpop.xlane.xlu0 %828
    %v830 = vsub.f32 %v825, %v829
    %v831 = vmul.f32 %v830, 1.442695
    %v832 = vpow.pop %v831
    %v833 = vsel %vm826, %v832, 0.0
    %834 = vadd.xlane.f32.xlu0 %v833
    %v835 = vpop.xlane.xlu0 %834
    %v836 = vlog2.pop %v835
    %v837 = vmul.f32 %v836, 0.6931472
    %v838 = vsub.f32 %v830, %v837
    %839 = vst.msk [vmem:[#allocation11] sm:$0xf] %vm826, %v838
    %vm840 = vcmask 257024
    %841 = vst.msk [vmem:[#allocation13] sm:$0xf] %vm840, %v795
    %842 = vst.msk [vmem:[#allocation10] sm:$0xff] %vm232, %v170
    %843 = vst.msk [vmem:[#allocation10 + $0x8] sm:$0xff] %vm232, %v173
    %844 = vst.msk [vmem:[#allocation10 + $0x10] sm:$0xf] %vm840, %v176
    // Predicated region
    $region98: #{tpu_custom_call.1} parent=1 // pred_check
      _
    $region99: #{tpu_custom_call.1} parent=1 // pred_check_branch
      %846 = sbr.rel (0) target = $region101
    $region100: #{tpu_custom_call.1} parent=1 // pred_region
      %848 = vsyncadd [#allocation4], 0
      %s849 = sshll.u32 [#allocation10], 4
      %s850 = int_to_ptr.vmem [resolvable:$true] %s849
      %s851 = sshll.u32 %s20, 4
      %s852 = int_to_ptr.hbm [resolvable:$true] %s851
      %857 = dma.vmem_to_hbm [thread:$0]  %s850, 384, %s852, [#allocation4], 128, 128, 8
    $region101: #{tpu_custom_call.1} parent=1 // pred_fallthru
      _
    // Predicated region
    $region102: #{tpu_custom_call.1} parent=1 // pred_check
      _
    $region103: #{tpu_custom_call.1} parent=1 // pred_check_branch
      %859 = sbr.rel (0) target = $region105
    $region104: #{tpu_custom_call.1} parent=1 // pred_region
      %861 = vsyncadd [#allocation12], 0
      %s863 = sshll.u32 [#allocation11], 4
      %s864 = int_to_ptr.vmem [resolvable:$true] %s863
      %s865 = sshll.u32 %s21, 4
      %s866 = int_to_ptr.hbm [resolvable:$true] %s865
      %868 = dma.vmem_to_hbm [thread:$0]  %s864, 64, %s866, [#allocation12]
    $region105: #{tpu_custom_call.1} parent=1 // pred_fallthru
      _
    // Predicated region
    $region106: #{tpu_custom_call.1} parent=1 // pred_check
      _
    $region107: #{tpu_custom_call.1} parent=1 // pred_check_branch
      %870 = sbr.rel (0) target = $region109
    $region108: #{tpu_custom_call.1} parent=1 // pred_region
      %872 = vsyncadd [#allocation12], 0
      %s874 = sshll.u32 [#allocation13], 4
      %s875 = int_to_ptr.vmem [resolvable:$true] %s874
      %s876 = sshll.u32 %s22, 4
      %s877 = int_to_ptr.hbm [resolvable:$true] %s876
      %879 = dma.vmem_to_hbm [thread:$0]  %s875, 64, %s877, [#allocation12]
    $region109: #{tpu_custom_call.1} parent=1 // pred_fallthru
      _
    // Predicated region
    $region110: #{tpu_custom_call.1} parent=1 // pred_check
      _
    $region111: #{tpu_custom_call.1} parent=1 // pred_check_branch
      %881 = sbr.rel (0) target = $region113
    $region112: #{tpu_custom_call.1} parent=1 // pred_region
      %883 = dma.done [#allocation4], 384
    $region113: #{tpu_custom_call.1} parent=1 // pred_fallthru
      _
    // Predicated region
    $region114: #{tpu_custom_call.1} parent=1 // pred_check
      _
    $region115: #{tpu_custom_call.1} parent=1 // pred_check_branch
      %885 = sbr.rel (0) target = $region117
    $region116: #{tpu_custom_call.1} parent=1 // pred_region
      %887 = dma.done [#allocation12], 64
    $region117: #{tpu_custom_call.1} parent=1 // pred_fallthru
      _
    // Predicated region
    $region118: #{tpu_custom_call.1} parent=1 // pred_check
      _
    $region119: #{tpu_custom_call.1} parent=1 // pred_check_branch
      %889 = sbr.rel (0) target = $region121
    $region120: #{tpu_custom_call.1} parent=1 // pred_region
      %891 = dma.done [#allocation12], 64
    $region121: #{tpu_custom_call.1} parent=1 // pred_fallthru
      _
    %892 = vsyncpa [#allocation3], 1
    %893 = vsyncpa [#allocation6], 1
    %894 = vsyncpa [#allocation9], 1
    %895 = vsyncpa [#allocation4], 1
    %896 = vsyncpa [#allocation12], 1

</llo_original>
